<compile_context>
chip_gen: v7x
topology: tpu7x:2x2x1
jax: 0.10.0
libtpu: 0.0.40
codegen_flags: <defaults>
</compile_context>

<pallas_src>
import jax
import jax.numpy as jnp
from jax.experimental import pallas as pl
from jax.experimental.pallas import tpu as pltpu


def _pos_embed_kernel(w_flat_ref, out_ref):
    # w_flat_ref: (1, seq*d_model) lane-dense slab of w_pos[:seq].
    # out_ref:    (b_tile, seq*d_model) — broadcast along the sublane axis.
    out_ref[...] = jnp.broadcast_to(w_flat_ref[...], out_ref.shape)


def pos_embed(tokens: jax.Array, w_pos: jax.Array,
              *, target_block_bytes: int = 4 * 1024 * 1024) -> jax.Array:
    """Returns w_pos[:seq] broadcast to (batch, seq, d_model)."""
    batch, seq = tokens.shape
    block_size, d_model = w_pos.shape
    assert seq <= block_size

    # Layout plumbing (no compute): lane-dense views of the table and output.
    row = seq * d_model
    itemsize = jnp.dtype(w_pos.dtype).itemsize
    row_bytes = row * itemsize
    w_flat = w_pos[:seq, :].reshape(1, row)

    # Fold batch rows into one output block of ~target_block_bytes.
    # b_tile is either the full batch (always a legal block dim) or a multiple
    # of 8 (legal second-minor block dim); a ragged final block is masked by
    # Pallas automatically.
    if batch * row_bytes <= target_block_bytes or batch <= 8:
        b_tile = batch
    else:
        b_tile = max(8, (target_block_bytes // row_bytes) // 8 * 8)

    grid = (pl.cdiv(batch, b_tile),)

    out_flat = pl.pallas_call(
        _pos_embed_kernel,
        out_shape=jax.ShapeDtypeStruct((batch, row), w_pos.dtype),
        grid_spec=pltpu.PrefetchScalarGridSpec(
            num_scalar_prefetch=0,
            grid=grid,
            in_specs=[
                # Same (full) w_pos slab for every batch tile.
                pl.BlockSpec((1, row), lambda b: (0, 0)),
            ],
            out_specs=pl.BlockSpec((b_tile, row), lambda b: (b, 0)),
        ),
        compiler_params=pltpu.CompilerParams(
            dimension_semantics=("parallel",),
        ),
        cost_estimate=pl.CostEstimate(
            flops=0,
            transcendentals=0,
            bytes_accessed=(batch * row + row) * itemsize,
        ),
    )(w_flat)

    return out_flat.reshape(batch, seq, d_model)


if __name__ == "__main__":
    # cfg: block_size=16, d_model=32, init_range=0.02; tokens: batch=2, seq=8
    block_size, d_model, init_range = 16, 32, 0.02
    batch, seq = 2, 8

    key = jax.random.PRNGKey(0)
    k_w, k_tok = jax.random.split(key)

    # Deterministic parameter init: normal(std=init_range), like nn.init.normal_.
    w_pos = (init_range * jax.random.normal(k_w, (block_size, d_model))).astype(jnp.float32)
    tokens = jax.random.randint(k_tok, (batch, seq), 0, 100, dtype=jnp.int32)

    out = pos_embed(tokens, w_pos)
    out = jax.block_until_ready(out)

    # Reference check in plain JAX.
    ref = jnp.broadcast_to(w_pos[:seq, :][None, :, :], (batch, seq, d_model))
    assert out.shape == (batch, seq, d_model)
    assert out.dtype == jnp.float32
    assert jnp.allclose(out, ref)

    print("KERNEL_OK")
</pallas_src>

<mosaic_0001>
module attributes {stable_mosaic.version = 11 : i64} {
  func.func @_pos_embed_kernel(%arg0: i32, %arg1: memref<1x256xf32, #tpu.memory_space<vmem>>, %arg2: memref<2x256xf32, #tpu.memory_space<vmem>>) attributes {dimension_semantics = [#tpu.dimension_semantics<parallel>], iteration_bounds = array<i64: 1>, scalar_prefetch = 0 : i64, scratch_operands = 0 : i64, tpu.core_type = #tpu.core_type<tc>, window_params = [{pipeline_mode = #tpu.pipeline_mode<synchronous>, transform_indices = @transform_0, window_bounds = array<i64: 1, 256>}, {transform_indices = @transform_1, window_bounds = array<i64: 2, 256>}]} {
    %c0 = arith.constant 0 : index
    %c0_0 = arith.constant 0 : index
    %0 = vector.load %arg1[%c0, %c0_0] : memref<1x256xf32, #tpu.memory_space<vmem>>, vector<1x256xf32>
    %1 = vector.shape_cast %0 : vector<1x256xf32> to vector<1x256xf32>
    %2 = vector.broadcast %1 : vector<1x256xf32> to vector<2x256xf32>
    %c0_1 = arith.constant 0 : index
    %c0_2 = arith.constant 0 : index
    %3 = vector.load %arg2[%c0_1, %c0_2] : memref<2x256xf32, #tpu.memory_space<vmem>>, vector<2x256xf32>
    tpu.vector_store %arg2[%c0_1, %c0_2], %2 {strides = array<i32>} : memref<2x256xf32, #tpu.memory_space<vmem>>, vector<2x256xf32>,
    return
  }
  func.func @transform_0(%arg0: i32) -> (i32, i32) {
    %c0_i32 = arith.constant 0 : i32
    %c0_i32_0 = arith.constant 0 : i32
    %c0_i32_1 = arith.constant 0 : i32
    return %c0_i32, %c0_i32_0 : i32, i32
  }
  func.func @transform_1(%arg0: i32) -> (i32, i32) {
    %c0_i32 = arith.constant 0 : i32
    %c0_i32_0 = arith.constant 0 : i32
    return %arg0, %c0_i32 : i32, i32
  }
}

</mosaic_0001>

<llo_original>
// kernel: tpu_custom_call.1
$region0: #{tpu_custom_call.1}
  #allocation0 [shape = 'u32[]', space=smem, size = 0x4, offset = 0x4, fixed_abs, tag = 'smem constant byte address 0x4 - core index']
  #allocation1 [shape = 'u32[144,128]{1,0:T(1,128)}', space=vmem, size = 0x12000, scoped, tag = 'internal scratch']
  %s0 = inlined_call_operand.hbm [shape: f32[1,256], index: 0, kind: input, shape index: {}]
  %s1 = inlined_call_operand.hbm [shape: f32[2,256], index: 1, kind: output, shape index: {}]
  %s2 = sld [smem:[#allocation0]]
  $region18: #{tpu_custom_call.1} parent=0
    _
  %s4 = ssub.s32 1, %s2
  %s5 = scalar_select 0, %s4, %s2
  $region1: #{tpu_custom_call.1} parent=0
    #allocation2 [shape = 'u8[1024]{0}', space=vmem, size = 0x400, scoped, tag = 'input window, operand 0, single buffered']
    #allocation3 [shape = 's32[1]{0}', space=sflag, size = 0x4, scoped, tag = 'scoped memory for tpu_custom_call.1']
    #allocation4 [shape = 's32[1]{0}', space=sflag, size = 0x4, scoped, tag = 'scoped memory for tpu_custom_call.1']
    #allocation5 [shape = 'u8[2048]{0}', space=vmem, size = 0x800, scoped, tag = 'output window, operand 0, single buffered']
    %6 = vsyncpa [#allocation3], 0
    %7 = vsyncpa [#allocation4], 0
    // Predicated region
    $region2: #{tpu_custom_call.1} parent=1 // pred_check
      _
    $region3: #{tpu_custom_call.1} parent=1 // pred_check_branch
      %9 = sbr.rel (0) target = $region5
    $region4: #{tpu_custom_call.1} parent=1 // pred_region
      %s11 = ssub.s32 32, 32
      %12 = vsyncadd [#allocation3], %s11
      %s14 = sshll.u32 [#allocation2], 4
      %s15 = int_to_ptr.vmem [resolvable:$true] %s14
      %17 = dma.hbm_to_vmem [thread:$0]  %s0, 32, %s15, [#allocation3]
    $region5: #{tpu_custom_call.1} parent=1 // pred_fallthru
      _
    // Predicated region
    $region6: #{tpu_custom_call.1} parent=1 // pred_check
      _
    $region7: #{tpu_custom_call.1} parent=1 // pred_check_branch
      %19 = sbr.rel (0) target = $region9
    $region8: #{tpu_custom_call.1} parent=1 // pred_region
      %20 = dma.done [#allocation3], 32
    $region9: #{tpu_custom_call.1} parent=1 // pred_fallthru
      _
    %v21 = vld [vmem:[#allocation2] sm:$0x3]
    %v23 = vlaneseq
    %v24 = vshrl.u32 %v23, 7
    %v25 = vsub.s32 0, %v24
    %v26 = vrot.slane %v21, %v25
    %v27 = vlaneseq
    %v28 = vshrl.u32 %v27, 7
    %v29 = vsub.s32 1, %v28
    %v30 = vrot.slane %v21, %v29
    %v31 = vcombine.low %v26, %v30
    %v33 = vunpack.c.l.s4 1983009808
    %v34 = vunpack.c.0.s8 %v33
    %v35 = vlaneseq
    %v36 = vshrl.u32 %v35, 7
    %v37 = vsub.s32 %v34, %v36
    %v38 = vrot.slane %v31, %v37
    %40 = vst [vmem:[#allocation5] sm:$0xf] %v38
    // Predicated region
    $region10: #{tpu_custom_call.1} parent=1 // pred_check
      _
    $region11: #{tpu_custom_call.1} parent=1 // pred_check_branch
      %42 = sbr.rel (0) target = $region13
    $region12: #{tpu_custom_call.1} parent=1 // pred_region
      %s44 = ssub.s32 64, 64
      %45 = vsyncadd [#allocation4], %s44
      %s47 = sshll.u32 [#allocation5], 4
      %s48 = int_to_ptr.vmem [resolvable:$true] %s47
      %50 = dma.vmem_to_hbm [thread:$0]  %s48, 64, %s1, [#allocation4]
    $region13: #{tpu_custom_call.1} parent=1 // pred_fallthru
      _
    // Predicated region
    $region14: #{tpu_custom_call.1} parent=1 // pred_check
      _
    $region15: #{tpu_custom_call.1} parent=1 // pred_check_branch
      %52 = sbr.rel (0) target = $region17
    $region16: #{tpu_custom_call.1} parent=1 // pred_region
      %53 = dma.done [#allocation4], 64
    $region17: #{tpu_custom_call.1} parent=1 // pred_fallthru
      _
    %54 = vsyncpa [#allocation3], 1
    %55 = vsyncpa [#allocation4], 1

</llo_original>
